<compile_context>
chip_gen: v7x
topology: tpu7x:2x2x1
jax: 0.10.0
libtpu: 0.0.40
codegen_flags: <defaults>
</compile_context>

<pallas_src>
import functools
import math

import jax
import jax.numpy as jnp
from jax.experimental import pallas as pl
from jax.experimental.pallas import tpu as pltpu


def _merge_ln_reduce_kernel(x_ref, wa_ref, wb_ref, bias_ref, o_ref, *, eps):
    # x_ref:    (tr, 2, Wh, 2C) block of x.reshape(B*Hh, 2, Wh, 2C)
    #           [:, 0] = even input rows -> torch features [x0 | x2]
    #           [:, 1] = odd  input rows -> torch features [x1 | x3]
    # wa_ref:   (2C, out) gamma-folded weight rows matching the even-row features
    # wb_ref:   (2C, out) gamma-folded weight rows matching the odd-row features
    # bias_ref: (1, out)  beta @ W^T
    # o_ref:    (tr*Wh, out)
    tr, _, wh, c2 = x_ref.shape
    p = tr * wh
    inv_n = 1.0 / (2.0 * c2)  # 1 / (4C)

    a = x_ref[:, 0, :, :].astype(jnp.float32)  # (tr, Wh, 2C)
    b = x_ref[:, 1, :, :].astype(jnp.float32)  # (tr, Wh, 2C)

    # One-pass LayerNorm statistics over the 4C features (biased variance).
    s1 = jnp.sum(a, axis=-1, keepdims=True) + jnp.sum(b, axis=-1, keepdims=True)
    s2 = jnp.sum(a * a, axis=-1, keepdims=True) + jnp.sum(b * b, axis=-1, keepdims=True)
    mean = s1 * inv_n
    var = s2 * inv_n - mean * mean
    inv_std = jax.lax.rsqrt(var + eps)
    shift = mean * inv_std

    # Fused normalize (gamma lives in the folded weights, beta in the bias row).
    ya = (a * inv_std - shift).astype(wa_ref.dtype)
    yb = (b * inv_std - shift).astype(wb_ref.dtype)

    # Free sublane view: wrapper guarantees Wh % 8 == 0.
    ya2 = ya.reshape(p, c2)
    yb2 = yb.reshape(p, c2)

    acc = jnp.dot(ya2, wa_ref[...], preferred_element_type=jnp.float32)
    acc = acc + jnp.dot(yb2, wb_ref[...], preferred_element_type=jnp.float32)
    acc = acc + bias_ref[...].astype(jnp.float32)

    # TODO(synk): out_dim is usually not a multiple of 128 so this is a masked store;
    # a lane-dense repack would need a sublane->lane relayout (see header note).
    o_ref[...] = acc.astype(o_ref.dtype)


def _pick_row_tile(R, Wh, target_flat_rows):
    """Row-tile tr (<= R) so tr*Wh ~<= target flat rows; >= 4 steps on big problems."""
    tr = max(1, min(R, target_flat_rows // max(Wh, 1)))
    # Keep >= ~4 grid steps on large problems so the "parallel" axis feeds both
    # TensorCores on v7x (megacore) without forcing tiny steps on small problems.
    if R * Wh >= 4096 and R >= 4:
        tr = min(tr, -(R // -4))
    return tr


def _reference(x, gamma, beta, weight, eps=1e-5):
    """Pure-JAX reference matching the PyTorch module exactly."""
    B, H, W, C = x.shape
    if (H % 2) or (W % 2):
        x = jnp.pad(x, ((0, 0), (0, H % 2), (0, W % 2), (0, 0)))
    x0 = x[:, 0::2, 0::2, :]
    x1 = x[:, 1::2, 0::2, :]
    x2 = x[:, 0::2, 1::2, :]
    x3 = x[:, 1::2, 1::2, :]
    xm = jnp.concatenate([x0, x1, x2, x3], axis=-1)
    mean = jnp.mean(xm, axis=-1, keepdims=True)
    var = jnp.mean((xm - mean) ** 2, axis=-1, keepdims=True)
    xn = (xm - mean) * jax.lax.rsqrt(var + eps) * gamma + beta
    return jnp.einsum("bhwc,oc->bhwo", xn, weight,
                      precision=jax.lax.Precision.HIGHEST)


def patch_merging_2d(x, gamma, beta, weight, *, eps=1e-5, max_block_rows=None):
    """PatchMerging2D forward.

    x: (B, H, W, C) channels-last; gamma/beta: (4C,); weight: (out, 4C) (nn.Linear
    layout).  Returns (B, ceil(H/2), ceil(W/2), out)."""
    B, H, W, C = x.shape
    pad_h, pad_w = H % 2, W % 2
    Hh, Wh = (H + pad_h) // 2, (W + pad_w) // 2
    # Extra output columns so Wh % 8 == 0: keeps the in-kernel (tr, Wh) -> rows merge
    # a free sublane view on every chip; padded columns are sliced off at the end.
    wpad = (-Wh) % 8
    Whp = Wh + wpad
    if pad_h or pad_w or wpad:
        x = jnp.pad(x, ((0, 0), (0, pad_h), (0, pad_w + 2 * wpad), (0, 0)))

    C2, C4 = 2 * C, 4 * C
    out_dim = weight.shape[0]
    R = B * Hh
    N = R * Whp

    # Free (no-copy) view: (B, 2*Hh, 2*Whp, C) -> (R, 2, Whp, 2C).
    xr = x.reshape(R, 2, Whp, C2)

    # Fold gamma into the weight (rows permuted to the kernel's [x0,x2 | x1,x3]
    # feature split) and beta into a precomputed bias row.
    wT = jnp.transpose(weight).astype(jnp.float32)  # (4C, out); module does x @ W.T
    gw = wT * gamma.astype(jnp.float32)[:, None]
    w_even = jnp.concatenate([gw[0:C], gw[2 * C:3 * C]], axis=0)   # (2C, out)
    w_odd = jnp.concatenate([gw[C:2 * C], gw[3 * C:4 * C]], axis=0)  # (2C, out)
    bias = jnp.sum(beta.astype(jnp.float32)[:, None] * wT, axis=0, keepdims=True)  # (1, out)

    # MXU-friendly operand dtype (bf16 models keep the native bf16 MXU path).
    op_dtype = x.dtype
    w_even = w_even.astype(op_dtype)
    w_odd = w_odd.astype(op_dtype)

    x_it = jnp.dtype(x.dtype).itemsize
    op_it = jnp.dtype(op_dtype).itemsize

    # VMEM-budgeted tile size: double-buffered blocks + f32/op-dtype intermediates.
    vmem_budget = 24 * 1024 * 1024
    weight_bytes = 2 * (C4 * out_dim + out_dim) * op_it          # resident weights+bias
    per_row = (2 * C4 * x_it          # input block rows (double-buffered)
               + 2 * out_dim * x_it   # output block rows (double-buffered)
               + C4 * (8 + op_it)     # f32 copies/squares + normalized activations
               + 8 * out_dim)         # f32 accumulator + store cast
    target_rows = max(256, min(8192, (vmem_budget - weight_bytes) // max(per_row, 1)))
    if max_block_rows is not None:
        target_rows = max(1, min(target_rows, max_block_rows))

    tr = _pick_row_tile(R, Whp, target_rows)
    rows_per_block = tr * Whp          # always a multiple of 8 (Whp % 8 == 0)
    grid = (pl.cdiv(R, tr),)           # cdiv grid: partial tail block is clipped

    cost = pl.CostEstimate(
        flops=2 * N * C4 * out_dim,
        transcendentals=N,
        bytes_accessed=N * (C4 + out_dim) * x_it + C4 * out_dim * op_it,
    )

    out2d = pl.pallas_call(
        functools.partial(_merge_ln_reduce_kernel, eps=eps),
        out_shape=jax.ShapeDtypeStruct((N, out_dim), x.dtype),
        grid=grid,
        in_specs=[
            pl.BlockSpec((tr, 2, Whp, C2), lambda i: (i, 0, 0, 0)),
            pl.BlockSpec((C2, out_dim), lambda i: (0, 0)),
            pl.BlockSpec((C2, out_dim), lambda i: (0, 0)),
            pl.BlockSpec((1, out_dim), lambda i: (0, 0)),
        ],
        out_specs=pl.BlockSpec((rows_per_block, out_dim), lambda i: (i, 0)),
        compiler_params=pltpu.CompilerParams(
            dimension_semantics=("parallel",),
            vmem_limit_bytes=48 * 1024 * 1024,
        ),
        cost_estimate=cost,
    )(xr, w_even, w_odd, bias)

    out = out2d.reshape(B, Hh, Whp, out_dim)
    if wpad:
        out = out[:, :, :Wh, :]
    return out


if __name__ == "__main__":
    key = jax.random.PRNGKey(0)
    k_x1, k_x2, k_w, k_g, k_b = jax.random.split(key, 5)

    # PatchMerging2D(dim=32): LayerNorm(128), Linear(128 -> 64, bias=False),
    # channels-last input (B, H, W, C).
    B, H, W, C = 2, 16, 16, 32
    in_feat, out_feat = 4 * C, 2 * C

    weight = jax.random.normal(k_w, (out_feat, in_feat), dtype=jnp.float32) * 0.05
    gamma = 1.0 + 0.1 * jax.random.normal(k_g, (in_feat,), dtype=jnp.float32)
    beta = 0.1 * jax.random.normal(k_b, (in_feat,), dtype=jnp.float32)

    # Case 1: aligned shapes, VMEM-budgeted large block.
    x1 = jax.random.normal(k_x1, (B, H, W, C), dtype=jnp.float32)
    out1 = jax.block_until_ready(jax.jit(patch_merging_2d)(x1, gamma, beta, weight))
    ref1 = _reference(x1, gamma, beta, weight)
    assert out1.shape == (B, H // 2, W // 2, out_feat)
    assert jnp.max(jnp.abs(out1 - ref1)) < 2e-2  # slack for MXU f32 pass strategy

    # Case 2: odd H (zero-pad path), W with Wh % 8 != 0 (sublane pad + output slice),
    # and a small forced block so the cdiv grid has a partial tail block.
    x2 = jax.random.normal(k_x2, (2, 17, 14, C), dtype=jnp.float32)
    fwd2 = jax.jit(functools.partial(patch_merging_2d, max_block_rows=64))
    out2 = jax.block_until_ready(fwd2(x2, gamma, beta, weight))
    ref2 = _reference(x2, gamma, beta, weight)
    assert out2.shape == (2, 9, 7, out_feat)
    assert jnp.max(jnp.abs(out2 - ref2)) < 2e-2

    print("KERNEL_OK")
</pallas_src>

<mosaic_0001>
module attributes {stable_mosaic.version = 11 : i64} {
  func.func @_merge_ln_reduce_kernel(%arg0: i32, %arg1: memref<16x2x8x64xf32, #tpu.memory_space<vmem>>, %arg2: memref<64x64xf32, #tpu.memory_space<vmem>>, %arg3: memref<64x64xf32, #tpu.memory_space<vmem>>, %arg4: memref<1x64xf32, #tpu.memory_space<vmem>>, %arg5: memref<128x64xf32, #tpu.memory_space<vmem>>) attributes {dimension_semantics = [#tpu.dimension_semantics<parallel>], iteration_bounds = array<i64: 1>, scalar_prefetch = 0 : i64, scratch_operands = 0 : i64, tpu.core_type = #tpu.core_type<tc>, window_params = [{transform_indices = @transform_0, window_bounds = array<i64: 16, 2, 8, 64>}, {pipeline_mode = #tpu.pipeline_mode<synchronous>, transform_indices = @transform_1, window_bounds = array<i64: 64, 64>}, {pipeline_mode = #tpu.pipeline_mode<synchronous>, transform_indices = @transform_2, window_bounds = array<i64: 64, 64>}, {pipeline_mode = #tpu.pipeline_mode<synchronous>, transform_indices = @transform_3, window_bounds = array<i64: 1, 64>}, {transform_indices = @transform_4, window_bounds = array<i64: 128, 64>}]} {
    %c0 = arith.constant 0 : index
    %c0_0 = arith.constant 0 : index
    %c0_1 = arith.constant 0 : index
    %c0_2 = arith.constant 0 : index
    %0 = vector.load %arg1[%c0, %c0_0, %c0_1, %c0_2] : memref<16x2x8x64xf32, #tpu.memory_space<vmem>>, vector<16x1x8x64xf32>
    %1 = vector.shape_cast %0 : vector<16x1x8x64xf32> to vector<16x8x64xf32>
    %c0_3 = arith.constant 0 : index
    %c1 = arith.constant 1 : index
    %c0_4 = arith.constant 0 : index
    %c0_5 = arith.constant 0 : index
    %2 = vector.load %arg1[%c0_3, %c1, %c0_4, %c0_5] : memref<16x2x8x64xf32, #tpu.memory_space<vmem>>, vector<16x1x8x64xf32>
    %3 = vector.shape_cast %2 : vector<16x1x8x64xf32> to vector<16x8x64xf32>
    %cst = arith.constant dense<0.000000e+00> : vector<16x8xf32>
    %4 = vector.multi_reduction <add>, %1, %cst [2] : vector<16x8x64xf32> to vector<16x8xf32>
    %5 = vector.shape_cast %4 : vector<16x8xf32> to vector<16x8x1xf32>
    %cst_6 = arith.constant dense<0.000000e+00> : vector<16x8xf32>
    %6 = vector.multi_reduction <add>, %3, %cst_6 [2] : vector<16x8x64xf32> to vector<16x8xf32>
    %7 = vector.shape_cast %6 : vector<16x8xf32> to vector<16x8x1xf32>
    %8 = arith.addf %5, %7 : vector<16x8x1xf32>
    %9 = arith.mulf %1, %1 : vector<16x8x64xf32>
    %cst_7 = arith.constant dense<0.000000e+00> : vector<16x8xf32>
    %10 = vector.multi_reduction <add>, %9, %cst_7 [2] : vector<16x8x64xf32> to vector<16x8xf32>
    %11 = vector.shape_cast %10 : vector<16x8xf32> to vector<16x8x1xf32>
    %12 = arith.mulf %3, %3 : vector<16x8x64xf32>
    %cst_8 = arith.constant dense<0.000000e+00> : vector<16x8xf32>
    %13 = vector.multi_reduction <add>, %12, %cst_8 [2] : vector<16x8x64xf32> to vector<16x8xf32>
    %14 = vector.shape_cast %13 : vector<16x8xf32> to vector<16x8x1xf32>
    %15 = arith.addf %11, %14 : vector<16x8x1xf32>
    %cst_9 = arith.constant 7.812500e-03 : f32
    %16 = vector.broadcast %cst_9 : f32 to vector<16x8x1xf32>
    %17 = arith.mulf %8, %16 : vector<16x8x1xf32>
    %cst_10 = arith.constant 7.812500e-03 : f32
    %18 = vector.broadcast %cst_10 : f32 to vector<16x8x1xf32>
    %19 = arith.mulf %15, %18 : vector<16x8x1xf32>
    %20 = arith.mulf %17, %17 : vector<16x8x1xf32>
    %21 = arith.subf %19, %20 : vector<16x8x1xf32>
    %cst_11 = arith.constant 9.99999974E-6 : f32
    %22 = vector.broadcast %cst_11 : f32 to vector<16x8x1xf32>
    %23 = arith.addf %21, %22 : vector<16x8x1xf32>
    %24 = math.rsqrt %23 : vector<16x8x1xf32>
    %25 = arith.mulf %17, %24 : vector<16x8x1xf32>
    %26 = vector.broadcast %24 : vector<16x8x1xf32> to vector<16x8x64xf32>
    %27 = arith.mulf %1, %26 : vector<16x8x64xf32>
    %28 = vector.broadcast %25 : vector<16x8x1xf32> to vector<16x8x64xf32>
    %29 = arith.subf %27, %28 : vector<16x8x64xf32>
    %30 = vector.broadcast %24 : vector<16x8x1xf32> to vector<16x8x64xf32>
    %31 = arith.mulf %3, %30 : vector<16x8x64xf32>
    %32 = vector.broadcast %25 : vector<16x8x1xf32> to vector<16x8x64xf32>
    %33 = arith.subf %31, %32 : vector<16x8x64xf32>
    %34 = vector.shape_cast %29 : vector<16x8x64xf32> to vector<128x64xf32>
    %35 = vector.shape_cast %33 : vector<16x8x64xf32> to vector<128x64xf32>
    %c0_12 = arith.constant 0 : index
    %c0_13 = arith.constant 0 : index
    %36 = vector.load %arg2[%c0_12, %c0_13] : memref<64x64xf32, #tpu.memory_space<vmem>>, vector<64x64xf32>
    %cst_14 = arith.constant dense<0.000000e+00> : vector<128x64xf32>
    %37 = tpu.matmul %34, %36, %cst_14 {dimension_numbers = #tpu.dot_dimension_numbers<[1], [0], [0], [1], [0, 0, 1, 1], [], []>} : vector<128x64xf32>, vector<64x64xf32>, vector<128x64xf32> -> vector<128x64xf32>
    %c0_15 = arith.constant 0 : index
    %c0_16 = arith.constant 0 : index
    %38 = vector.load %arg3[%c0_15, %c0_16] : memref<64x64xf32, #tpu.memory_space<vmem>>, vector<64x64xf32>
    %cst_17 = arith.constant dense<0.000000e+00> : vector<128x64xf32>
    %39 = tpu.matmul %35, %38, %cst_17 {dimension_numbers = #tpu.dot_dimension_numbers<[1], [0], [0], [1], [0, 0, 1, 1], [], []>} : vector<128x64xf32>, vector<64x64xf32>, vector<128x64xf32> -> vector<128x64xf32>
    %40 = arith.addf %37, %39 : vector<128x64xf32>
    %c0_18 = arith.constant 0 : index
    %c0_19 = arith.constant 0 : index
    %41 = vector.load %arg4[%c0_18, %c0_19] : memref<1x64xf32, #tpu.memory_space<vmem>>, vector<1x64xf32>
    %42 = vector.broadcast %41 : vector<1x64xf32> to vector<128x64xf32>
    %43 = arith.addf %40, %42 : vector<128x64xf32>
    %c0_20 = arith.constant 0 : index
    %c0_21 = arith.constant 0 : index
    %44 = vector.load %arg5[%c0_20, %c0_21] : memref<128x64xf32, #tpu.memory_space<vmem>>, vector<128x64xf32>
    tpu.vector_store %arg5[%c0_20, %c0_21], %43 {strides = array<i32>} : memref<128x64xf32, #tpu.memory_space<vmem>>, vector<128x64xf32>,
    return
  }
  func.func @transform_0(%arg0: i32) -> (i32, i32, i32, i32) {
    %c0_i32 = arith.constant 0 : i32
    %c0_i32_0 = arith.constant 0 : i32
    %c0_i32_1 = arith.constant 0 : i32
    %c0_i32_2 = arith.constant 0 : i32
    return %arg0, %c0_i32, %c0_i32_0, %c0_i32_1 : i32, i32, i32, i32
  }
  func.func @transform_1(%arg0: i32) -> (i32, i32) {
    %c0_i32 = arith.constant 0 : i32
    %c0_i32_0 = arith.constant 0 : i32
    %c0_i32_1 = arith.constant 0 : i32
    return %c0_i32, %c0_i32_0 : i32, i32
  }
  func.func @transform_2(%arg0: i32) -> (i32, i32) {
    %c0_i32 = arith.constant 0 : i32
    %c0_i32_0 = arith.constant 0 : i32
    %c0_i32_1 = arith.constant 0 : i32
    return %c0_i32, %c0_i32_0 : i32, i32
  }
  func.func @transform_3(%arg0: i32) -> (i32, i32) {
    %c0_i32 = arith.constant 0 : i32
    %c0_i32_0 = arith.constant 0 : i32
    %c0_i32_1 = arith.constant 0 : i32
    return %c0_i32, %c0_i32_0 : i32, i32
  }
  func.func @transform_4(%arg0: i32) -> (i32, i32) {
    %c0_i32 = arith.constant 0 : i32
    %c0_i32_0 = arith.constant 0 : i32
    return %arg0, %c0_i32 : i32, i32
  }
}

</mosaic_0001>

<llo_original>
// kernel: patch_merging_2d.1
$region0: #{patch_merging_2d.1}
  #allocation0 [shape = 'u32[]', space=smem, size = 0x4, offset = 0x4, fixed_abs, tag = 'smem constant byte address 0x4 - core index']
  #allocation1 [shape = 'u32[144,128]{1,0:T(1,128)}', space=vmem, size = 0x12000, scoped, tag = 'internal scratch']
  %s0 = inlined_call_operand.vmem [shape: f32[16,2,8,64], index: 0, kind: input, shape index: {}]
  %s1 = inlined_call_operand.vmem [shape: f32[64,64], index: 1, kind: input, shape index: {}]
  %s2 = inlined_call_operand.vmem [shape: f32[64,64], index: 2, kind: input, shape index: {}]
  %s3 = inlined_call_operand.vmem [shape: f32[1,64], index: 3, kind: input, shape index: {}]
  %s4 = inlined_call_operand.hbm [shape: f32[128,64], index: 4, kind: output, shape index: {}]
  %s5 = sld [smem:[#allocation0]]
  $region26: #{patch_merging_2d.1} parent=0
    _
  %s7 = ssub.s32 1, %s5
  %s8 = scalar_select 0, %s7, %s5
  $region1: #{patch_merging_2d.1} parent=0
    #allocation2 [shape = 'u8[65536]{0}', space=vmem, size = 0x10000, scoped, tag = 'output window, operand 0, single buffered']
    #allocation3 [shape = 's32[1]{0}', space=sflag, size = 0x4, scoped, tag = 'scoped memory for patch_merging_2d.1']
    %9 = vsyncpa [#allocation3], 0
    // Predicated region
    $region2: #{patch_merging_2d.1} parent=1 // pred_check
      _
    $region3: #{patch_merging_2d.1} parent=1 // pred_check_branch
      %11 = sbr.rel (0) target = $region5
    $region4: #{patch_merging_2d.1} parent=1 // pred_region
      _
    $region5: #{patch_merging_2d.1} parent=1 // pred_fallthru
      _
    // Predicated region
    $region6: #{patch_merging_2d.1} parent=1 // pred_check
      _
    $region7: #{patch_merging_2d.1} parent=1 // pred_check_branch
      %13 = sbr.rel (0) target = $region9
    $region8: #{patch_merging_2d.1} parent=1 // pred_region
      _
    $region9: #{patch_merging_2d.1} parent=1 // pred_fallthru
      _
    // Predicated region
    $region10: #{patch_merging_2d.1} parent=1 // pred_check
      _
    $region11: #{patch_merging_2d.1} parent=1 // pred_check_branch
      %15 = sbr.rel (0) target = $region13
    $region12: #{patch_merging_2d.1} parent=1 // pred_region
      _
    $region13: #{patch_merging_2d.1} parent=1 // pred_fallthru
      _
    // Predicated region
    $region14: #{patch_merging_2d.1} parent=1 // pred_check
      _
    $region15: #{patch_merging_2d.1} parent=1 // pred_check_branch
      %17 = sbr.rel (0) target = $region17
    $region16: #{patch_merging_2d.1} parent=1 // pred_region
      _
    $region17: #{patch_merging_2d.1} parent=1 // pred_fallthru
      _
    %v18 = vld [vmem:[%s0] sm:$0xff]
    %v19 = vld [vmem:[%s0 + $0x10] sm:$0xff]
    %v20 = vld [vmem:[%s0 + $0x20] sm:$0xff]
    %v21 = vld [vmem:[%s0 + $0x30] sm:$0xff]
    %v22 = vld [vmem:[%s0 + $0x40] sm:$0xff]
    %v23 = vld [vmem:[%s0 + $0x50] sm:$0xff]
    %v24 = vld [vmem:[%s0 + $0x60] sm:$0xff]
    %v25 = vld [vmem:[%s0 + $0x70] sm:$0xff]
    %v26 = vld [vmem:[%s0 + $0x80] sm:$0xff]
    %v27 = vld [vmem:[%s0 + $0x90] sm:$0xff]
    %v28 = vld [vmem:[%s0 + $0xa0] sm:$0xff]
    %v29 = vld [vmem:[%s0 + $0xb0] sm:$0xff]
    %v30 = vld [vmem:[%s0 + $0xc0] sm:$0xff]
    %v31 = vld [vmem:[%s0 + $0xd0] sm:$0xff]
    %v32 = vld [vmem:[%s0 + $0xe0] sm:$0xff]
    %v33 = vld [vmem:[%s0 + $0xf0] sm:$0xff]
    %s34 = scalar_lea.vmem %s0, 8
    %v35 = vld [vmem:[%s34] sm:$0xff]
    %v36 = vld [vmem:[%s34 + $0x10] sm:$0xff]
    %v37 = vld [vmem:[%s34 + $0x20] sm:$0xff]
    %v38 = vld [vmem:[%s34 + $0x30] sm:$0xff]
    %v39 = vld [vmem:[%s34 + $0x40] sm:$0xff]
    %v40 = vld [vmem:[%s34 + $0x50] sm:$0xff]
    %v41 = vld [vmem:[%s34 + $0x60] sm:$0xff]
    %v42 = vld [vmem:[%s34 + $0x70] sm:$0xff]
    %v43 = vld [vmem:[%s34 + $0x80] sm:$0xff]
    %v44 = vld [vmem:[%s34 + $0x90] sm:$0xff]
    %v45 = vld [vmem:[%s34 + $0xa0] sm:$0xff]
    %v46 = vld [vmem:[%s34 + $0xb0] sm:$0xff]
    %v47 = vld [vmem:[%s34 + $0xc0] sm:$0xff]
    %v48 = vld [vmem:[%s34 + $0xd0] sm:$0xff]
    %v49 = vld [vmem:[%s34 + $0xe0] sm:$0xff]
    %v50 = vld [vmem:[%s34 + $0xf0] sm:$0xff]
    %vm51 = vcmask 523264
    %v52 = vsel %vm51, %v18, 0.0
    %53 = vadd.xlane.f32.xlu0 %v52
    %v54 = vpop.xlane.xlu0 %53
    %v55 = vsel %vm51, %v19, 0.0
    %56 = vadd.xlane.f32.xlu0 %v55
    %v57 = vpop.xlane.xlu0 %56
    %v58 = vsel %vm51, %v20, 0.0
    %59 = vadd.xlane.f32.xlu0 %v58
    %v60 = vpop.xlane.xlu0 %59
    %v61 = vsel %vm51, %v21, 0.0
    %62 = vadd.xlane.f32.xlu0 %v61
    %v63 = vpop.xlane.xlu0 %62
    %v64 = vsel %vm51, %v22, 0.0
    %65 = vadd.xlane.f32.xlu0 %v64
    %v66 = vpop.xlane.xlu0 %65
    %v67 = vsel %vm51, %v23, 0.0
    %68 = vadd.xlane.f32.xlu0 %v67
    %v69 = vpop.xlane.xlu0 %68
    %v70 = vsel %vm51, %v24, 0.0
    %71 = vadd.xlane.f32.xlu0 %v70
    %v72 = vpop.xlane.xlu0 %71
    %v73 = vsel %vm51, %v25, 0.0
    %74 = vadd.xlane.f32.xlu0 %v73
    %v75 = vpop.xlane.xlu0 %74
    %v76 = vsel %vm51, %v26, 0.0
    %77 = vadd.xlane.f32.xlu0 %v76
    %v78 = vpop.xlane.xlu0 %77
    %v79 = vsel %vm51, %v27, 0.0
    %80 = vadd.xlane.f32.xlu0 %v79
    %v81 = vpop.xlane.xlu0 %80
    %v82 = vsel %vm51, %v28, 0.0
    %83 = vadd.xlane.f32.xlu0 %v82
    %v84 = vpop.xlane.xlu0 %83
    %v85 = vsel %vm51, %v29, 0.0
    %86 = vadd.xlane.f32.xlu0 %v85
    %v87 = vpop.xlane.xlu0 %86
    %v88 = vsel %vm51, %v30, 0.0
    %89 = vadd.xlane.f32.xlu0 %v88
    %v90 = vpop.xlane.xlu0 %89
    %v91 = vsel %vm51, %v31, 0.0
    %92 = vadd.xlane.f32.xlu0 %v91
    %v93 = vpop.xlane.xlu0 %92
    %v94 = vsel %vm51, %v32, 0.0
    %95 = vadd.xlane.f32.xlu0 %v94
    %v96 = vpop.xlane.xlu0 %95
    %v97 = vsel %vm51, %v33, 0.0
    %98 = vadd.xlane.f32.xlu0 %v97
    %v99 = vpop.xlane.xlu0 %98
    %v100 = vsel %vm51, %v35, 0.0
    %101 = vadd.xlane.f32.xlu0 %v100
    %v102 = vpop.xlane.xlu0 %101
    %v103 = vsel %vm51, %v36, 0.0
    %104 = vadd.xlane.f32.xlu0 %v103
    %v105 = vpop.xlane.xlu0 %104
    %v106 = vsel %vm51, %v37, 0.0
    %107 = vadd.xlane.f32.xlu0 %v106
    %v108 = vpop.xlane.xlu0 %107
    %v109 = vsel %vm51, %v38, 0.0
    %110 = vadd.xlane.f32.xlu0 %v109
    %v111 = vpop.xlane.xlu0 %110
    %v112 = vsel %vm51, %v39, 0.0
    %113 = vadd.xlane.f32.xlu0 %v112
    %v114 = vpop.xlane.xlu0 %113
    %v115 = vsel %vm51, %v40, 0.0
    %116 = vadd.xlane.f32.xlu0 %v115
    %v117 = vpop.xlane.xlu0 %116
    %v118 = vsel %vm51, %v41, 0.0
    %119 = vadd.xlane.f32.xlu0 %v118
    %v120 = vpop.xlane.xlu0 %119
    %v121 = vsel %vm51, %v42, 0.0
    %122 = vadd.xlane.f32.xlu0 %v121
    %v123 = vpop.xlane.xlu0 %122
    %v124 = vsel %vm51, %v43, 0.0
    %125 = vadd.xlane.f32.xlu0 %v124
    %v126 = vpop.xlane.xlu0 %125
    %v127 = vsel %vm51, %v44, 0.0
    %128 = vadd.xlane.f32.xlu0 %v127
    %v129 = vpop.xlane.xlu0 %128
    %v130 = vsel %vm51, %v45, 0.0
    %131 = vadd.xlane.f32.xlu0 %v130
    %v132 = vpop.xlane.xlu0 %131
    %v133 = vsel %vm51, %v46, 0.0
    %134 = vadd.xlane.f32.xlu0 %v133
    %v135 = vpop.xlane.xlu0 %134
    %v136 = vsel %vm51, %v47, 0.0
    %137 = vadd.xlane.f32.xlu0 %v136
    %v138 = vpop.xlane.xlu0 %137
    %v139 = vsel %vm51, %v48, 0.0
    %140 = vadd.xlane.f32.xlu0 %v139
    %v141 = vpop.xlane.xlu0 %140
    %v142 = vsel %vm51, %v49, 0.0
    %143 = vadd.xlane.f32.xlu0 %v142
    %v144 = vpop.xlane.xlu0 %143
    %v145 = vsel %vm51, %v50, 0.0
    %146 = vadd.xlane.f32.xlu0 %v145
    %v147 = vpop.xlane.xlu0 %146
    %v148 = vadd.f32 %v54, %v102
    %v149 = vadd.f32 %v57, %v105
    %v150 = vadd.f32 %v60, %v108
    %v151 = vadd.f32 %v63, %v111
    %v152 = vadd.f32 %v66, %v114
    %v153 = vadd.f32 %v69, %v117
    %v154 = vadd.f32 %v72, %v120
    %v155 = vadd.f32 %v75, %v123
    %v156 = vadd.f32 %v78, %v126
    %v157 = vadd.f32 %v81, %v129
    %v158 = vadd.f32 %v84, %v132
    %v159 = vadd.f32 %v87, %v135
    %v160 = vadd.f32 %v90, %v138
    %v161 = vadd.f32 %v93, %v141
    %v162 = vadd.f32 %v96, %v144
    %v163 = vadd.f32 %v99, %v147
    %v164 = vmul.f32 %v18, %v18
    %v165 = vmul.f32 %v19, %v19
    %v166 = vmul.f32 %v20, %v20
    %v167 = vmul.f32 %v21, %v21
    %v168 = vmul.f32 %v22, %v22
    %v169 = vmul.f32 %v23, %v23
    %v170 = vmul.f32 %v24, %v24
    %v171 = vmul.f32 %v25, %v25
    %v172 = vmul.f32 %v26, %v26
    %v173 = vmul.f32 %v27, %v27
    %v174 = vmul.f32 %v28, %v28
    %v175 = vmul.f32 %v29, %v29
    %v176 = vmul.f32 %v30, %v30
    %v177 = vmul.f32 %v31, %v31
    %v178 = vmul.f32 %v32, %v32
    %v179 = vmul.f32 %v33, %v33
    %v180 = vsel %vm51, %v164, 0.0
    %181 = vadd.xlane.f32.xlu0 %v180
    %v182 = vpop.xlane.xlu0 %181
    %v183 = vsel %vm51, %v165, 0.0
    %184 = vadd.xlane.f32.xlu0 %v183
    %v185 = vpop.xlane.xlu0 %184
    %v186 = vsel %vm51, %v166, 0.0
    %187 = vadd.xlane.f32.xlu0 %v186
    %v188 = vpop.xlane.xlu0 %187
    %v189 = vsel %vm51, %v167, 0.0
    %190 = vadd.xlane.f32.xlu0 %v189
    %v191 = vpop.xlane.xlu0 %190
    %v192 = vsel %vm51, %v168, 0.0
    %193 = vadd.xlane.f32.xlu0 %v192
    %v194 = vpop.xlane.xlu0 %193
    %v195 = vsel %vm51, %v169, 0.0
    %196 = vadd.xlane.f32.xlu0 %v195
    %v197 = vpop.xlane.xlu0 %196
    %v198 = vsel %vm51, %v170, 0.0
    %199 = vadd.xlane.f32.xlu0 %v198
    %v200 = vpop.xlane.xlu0 %199
    %v201 = vsel %vm51, %v171, 0.0
    %202 = vadd.xlane.f32.xlu0 %v201
    %v203 = vpop.xlane.xlu0 %202
    %v204 = vsel %vm51, %v172, 0.0
    %205 = vadd.xlane.f32.xlu0 %v204
    %v206 = vpop.xlane.xlu0 %205
    %v207 = vsel %vm51, %v173, 0.0
    %208 = vadd.xlane.f32.xlu0 %v207
    %v209 = vpop.xlane.xlu0 %208
    %v210 = vsel %vm51, %v174, 0.0
    %211 = vadd.xlane.f32.xlu0 %v210
    %v212 = vpop.xlane.xlu0 %211
    %v213 = vsel %vm51, %v175, 0.0
    %214 = vadd.xlane.f32.xlu0 %v213
    %v215 = vpop.xlane.xlu0 %214
    %v216 = vsel %vm51, %v176, 0.0
    %217 = vadd.xlane.f32.xlu0 %v216
    %v218 = vpop.xlane.xlu0 %217
    %v219 = vsel %vm51, %v177, 0.0
    %220 = vadd.xlane.f32.xlu0 %v219
    %v221 = vpop.xlane.xlu0 %220
    %v222 = vsel %vm51, %v178, 0.0
    %223 = vadd.xlane.f32.xlu0 %v222
    %v224 = vpop.xlane.xlu0 %223
    %v225 = vsel %vm51, %v179, 0.0
    %226 = vadd.xlane.f32.xlu0 %v225
    %v227 = vpop.xlane.xlu0 %226
    %v228 = vmul.f32 %v35, %v35
    %v229 = vmul.f32 %v36, %v36
    %v230 = vmul.f32 %v37, %v37
    %v231 = vmul.f32 %v38, %v38
    %v232 = vmul.f32 %v39, %v39
    %v233 = vmul.f32 %v40, %v40
    %v234 = vmul.f32 %v41, %v41
    %v235 = vmul.f32 %v42, %v42
    %v236 = vmul.f32 %v43, %v43
    %v237 = vmul.f32 %v44, %v44
    %v238 = vmul.f32 %v45, %v45
    %v239 = vmul.f32 %v46, %v46
    %v240 = vmul.f32 %v47, %v47
    %v241 = vmul.f32 %v48, %v48
    %v242 = vmul.f32 %v49, %v49
    %v243 = vmul.f32 %v50, %v50
    %v244 = vsel %vm51, %v228, 0.0
    %245 = vadd.xlane.f32.xlu0 %v244
    %v246 = vpop.xlane.xlu0 %245
    %v247 = vsel %vm51, %v229, 0.0
    %248 = vadd.xlane.f32.xlu0 %v247
    %v249 = vpop.xlane.xlu0 %248
    %v250 = vsel %vm51, %v230, 0.0
    %251 = vadd.xlane.f32.xlu0 %v250
    %v252 = vpop.xlane.xlu0 %251
    %v253 = vsel %vm51, %v231, 0.0
    %254 = vadd.xlane.f32.xlu0 %v253
    %v255 = vpop.xlane.xlu0 %254
    %v256 = vsel %vm51, %v232, 0.0
    %257 = vadd.xlane.f32.xlu0 %v256
    %v258 = vpop.xlane.xlu0 %257
    %v259 = vsel %vm51, %v233, 0.0
    %260 = vadd.xlane.f32.xlu0 %v259
    %v261 = vpop.xlane.xlu0 %260
    %v262 = vsel %vm51, %v234, 0.0
    %263 = vadd.xlane.f32.xlu0 %v262
    %v264 = vpop.xlane.xlu0 %263
    %v265 = vsel %vm51, %v235, 0.0
    %266 = vadd.xlane.f32.xlu0 %v265
    %v267 = vpop.xlane.xlu0 %266
    %v268 = vsel %vm51, %v236, 0.0
    %269 = vadd.xlane.f32.xlu0 %v268
    %v270 = vpop.xlane.xlu0 %269
    %v271 = vsel %vm51, %v237, 0.0
    %272 = vadd.xlane.f32.xlu0 %v271
    %v273 = vpop.xlane.xlu0 %272
    %v274 = vsel %vm51, %v238, 0.0
    %275 = vadd.xlane.f32.xlu0 %v274
    %v276 = vpop.xlane.xlu0 %275
    %v277 = vsel %vm51, %v239, 0.0
    %278 = vadd.xlane.f32.xlu0 %v277
    %v279 = vpop.xlane.xlu0 %278
    %v280 = vsel %vm51, %v240, 0.0
    %281 = vadd.xlane.f32.xlu0 %v280
    %v282 = vpop.xlane.xlu0 %281
    %v283 = vsel %vm51, %v241, 0.0
    %284 = vadd.xlane.f32.xlu0 %v283
    %v285 = vpop.xlane.xlu0 %284
    %v286 = vsel %vm51, %v242, 0.0
    %287 = vadd.xlane.f32.xlu0 %v286
    %v288 = vpop.xlane.xlu0 %287
    %v289 = vsel %vm51, %v243, 0.0
    %290 = vadd.xlane.f32.xlu0 %v289
    %v291 = vpop.xlane.xlu0 %290
    %v292 = vadd.f32 %v182, %v246
    %v293 = vadd.f32 %v185, %v249
    %v294 = vadd.f32 %v188, %v252
    %v295 = vadd.f32 %v191, %v255
    %v296 = vadd.f32 %v194, %v258
    %v297 = vadd.f32 %v197, %v261
    %v298 = vadd.f32 %v200, %v264
    %v299 = vadd.f32 %v203, %v267
    %v300 = vadd.f32 %v206, %v270
    %v301 = vadd.f32 %v209, %v273
    %v302 = vadd.f32 %v212, %v276
    %v303 = vadd.f32 %v215, %v279
    %v304 = vadd.f32 %v218, %v282
    %v305 = vadd.f32 %v221, %v285
    %v306 = vadd.f32 %v224, %v288
    %v307 = vadd.f32 %v227, %v291
    %v308 = vmul.f32 %v148, 0.0078125
    %v309 = vmul.f32 %v149, 0.0078125
    %v310 = vmul.f32 %v150, 0.0078125
    %v311 = vmul.f32 %v151, 0.0078125
    %v312 = vmul.f32 %v152, 0.0078125
    %v313 = vmul.f32 %v153, 0.0078125
    %v314 = vmul.f32 %v154, 0.0078125
    %v315 = vmul.f32 %v155, 0.0078125
    %v316 = vmul.f32 %v156, 0.0078125
    %v317 = vmul.f32 %v157, 0.0078125
    %v318 = vmul.f32 %v158, 0.0078125
    %v319 = vmul.f32 %v159, 0.0078125
    %v320 = vmul.f32 %v160, 0.0078125
    %v321 = vmul.f32 %v161, 0.0078125
    %v322 = vmul.f32 %v162, 0.0078125
    %v323 = vmul.f32 %v163, 0.0078125
    %v324 = vmul.f32 %v292, 0.0078125
    %v325 = vmul.f32 %v293, 0.0078125
    %v326 = vmul.f32 %v294, 0.0078125
    %v327 = vmul.f32 %v295, 0.0078125
    %v328 = vmul.f32 %v296, 0.0078125
    %v329 = vmul.f32 %v297, 0.0078125
    %v330 = vmul.f32 %v298, 0.0078125
    %v331 = vmul.f32 %v299, 0.0078125
    %v332 = vmul.f32 %v300, 0.0078125
    %v333 = vmul.f32 %v301, 0.0078125
    %v334 = vmul.f32 %v302, 0.0078125
    %v335 = vmul.f32 %v303, 0.0078125
    %v336 = vmul.f32 %v304, 0.0078125
    %v337 = vmul.f32 %v305, 0.0078125
    %v338 = vmul.f32 %v306, 0.0078125
    %v339 = vmul.f32 %v307, 0.0078125
    %v340 = vmul.f32 %v308, %v308
    %v341 = vmul.f32 %v309, %v309
    %v342 = vmul.f32 %v310, %v310
    %v343 = vmul.f32 %v311, %v311
    %v344 = vmul.f32 %v312, %v312
    %v345 = vmul.f32 %v313, %v313
    %v346 = vmul.f32 %v314, %v314
    %v347 = vmul.f32 %v315, %v315
    %v348 = vmul.f32 %v316, %v316
    %v349 = vmul.f32 %v317, %v317
    %v350 = vmul.f32 %v318, %v318
    %v351 = vmul.f32 %v319, %v319
    %v352 = vmul.f32 %v320, %v320
    %v353 = vmul.f32 %v321, %v321
    %v354 = vmul.f32 %v322, %v322
    %v355 = vmul.f32 %v323, %v323
    %v356 = vsub.f32 %v324, %v340
    %v357 = vsub.f32 %v325, %v341
    %v358 = vsub.f32 %v326, %v342
    %v359 = vsub.f32 %v327, %v343
    %v360 = vsub.f32 %v328, %v344
    %v361 = vsub.f32 %v329, %v345
    %v362 = vsub.f32 %v330, %v346
    %v363 = vsub.f32 %v331, %v347
    %v364 = vsub.f32 %v332, %v348
    %v365 = vsub.f32 %v333, %v349
    %v366 = vsub.f32 %v334, %v350
    %v367 = vsub.f32 %v335, %v351
    %v368 = vsub.f32 %v336, %v352
    %v369 = vsub.f32 %v337, %v353
    %v370 = vsub.f32 %v338, %v354
    %v371 = vsub.f32 %v339, %v355
    %v372 = vadd.f32 %v356, 1e-05
    %v373 = vadd.f32 %v357, 1e-05
    %v374 = vadd.f32 %v358, 1e-05
    %v375 = vadd.f32 %v359, 1e-05
    %v376 = vadd.f32 %v360, 1e-05
    %v377 = vadd.f32 %v361, 1e-05
    %v378 = vadd.f32 %v362, 1e-05
    %v379 = vadd.f32 %v363, 1e-05
    %v380 = vadd.f32 %v364, 1e-05
    %v381 = vadd.f32 %v365, 1e-05
    %v382 = vadd.f32 %v366, 1e-05
    %v383 = vadd.f32 %v367, 1e-05
    %v384 = vadd.f32 %v368, 1e-05
    %v385 = vadd.f32 %v369, 1e-05
    %v386 = vadd.f32 %v370, 1e-05
    %v387 = vadd.f32 %v371, 1e-05
    %v388 = vrsqrt.pop %v372
    %v389 = vrsqrt.pop %v373
    %v390 = vrsqrt.pop %v374
    %v391 = vrsqrt.pop %v375
    %v392 = vrsqrt.pop %v376
    %v393 = vrsqrt.pop %v377
    %v394 = vrsqrt.pop %v378
    %v395 = vrsqrt.pop %v379
    %v396 = vrsqrt.pop %v380
    %v397 = vrsqrt.pop %v381
    %v398 = vrsqrt.pop %v382
    %v399 = vrsqrt.pop %v383
    %v400 = vrsqrt.pop %v384
    %v401 = vrsqrt.pop %v385
    %v402 = vrsqrt.pop %v386
    %v403 = vrsqrt.pop %v387
    %v404 = vmul.f32 %v308, %v388
    %v405 = vmul.f32 %v309, %v389
    %v406 = vmul.f32 %v310, %v390
    %v407 = vmul.f32 %v311, %v391
    %v408 = vmul.f32 %v312, %v392
    %v409 = vmul.f32 %v313, %v393
    %v410 = vmul.f32 %v314, %v394
    %v411 = vmul.f32 %v315, %v395
    %v412 = vmul.f32 %v316, %v396
    %v413 = vmul.f32 %v317, %v397
    %v414 = vmul.f32 %v318, %v398
    %v415 = vmul.f32 %v319, %v399
    %v416 = vmul.f32 %v320, %v400
    %v417 = vmul.f32 %v321, %v401
    %v418 = vmul.f32 %v322, %v402
    %v419 = vmul.f32 %v323, %v403
    %v420 = vmul.f32 %v18, %v388
    %v421 = vmul.f32 %v19, %v389
    %v422 = vmul.f32 %v20, %v390
    %v423 = vmul.f32 %v21, %v391
    %v424 = vmul.f32 %v22, %v392
    %v425 = vmul.f32 %v23, %v393
    %v426 = vmul.f32 %v24, %v394
    %v427 = vmul.f32 %v25, %v395
    %v428 = vmul.f32 %v26, %v396
    %v429 = vmul.f32 %v27, %v397
    %v430 = vmul.f32 %v28, %v398
    %v431 = vmul.f32 %v29, %v399
    %v432 = vmul.f32 %v30, %v400
    %v433 = vmul.f32 %v31, %v401
    %v434 = vmul.f32 %v32, %v402
    %v435 = vmul.f32 %v33, %v403
    %v436 = vsub.f32 %v420, %v404
    %v437 = vsub.f32 %v421, %v405
    %v438 = vsub.f32 %v422, %v406
    %v439 = vsub.f32 %v423, %v407
    %v440 = vsub.f32 %v424, %v408
    %v441 = vsub.f32 %v425, %v409
    %v442 = vsub.f32 %v426, %v410
    %v443 = vsub.f32 %v427, %v411
    %v444 = vsub.f32 %v428, %v412
    %v445 = vsub.f32 %v429, %v413
    %v446 = vsub.f32 %v430, %v414
    %v447 = vsub.f32 %v431, %v415
    %v448 = vsub.f32 %v432, %v416
    %v449 = vsub.f32 %v433, %v417
    %v450 = vsub.f32 %v434, %v418
    %v451 = vsub.f32 %v435, %v419
    %v452 = vmul.f32 %v35, %v388
    %v453 = vmul.f32 %v36, %v389
    %v454 = vmul.f32 %v37, %v390
    %v455 = vmul.f32 %v38, %v391
    %v456 = vmul.f32 %v39, %v392
    %v457 = vmul.f32 %v40, %v393
    %v458 = vmul.f32 %v41, %v394
    %v459 = vmul.f32 %v42, %v395
    %v460 = vmul.f32 %v43, %v396
    %v461 = vmul.f32 %v44, %v397
    %v462 = vmul.f32 %v45, %v398
    %v463 = vmul.f32 %v46, %v399
    %v464 = vmul.f32 %v47, %v400
    %v465 = vmul.f32 %v48, %v401
    %v466 = vmul.f32 %v49, %v402
    %v467 = vmul.f32 %v50, %v403
    %v468 = vsub.f32 %v452, %v404
    %v469 = vsub.f32 %v453, %v405
    %v470 = vsub.f32 %v454, %v406
    %v471 = vsub.f32 %v455, %v407
    %v472 = vsub.f32 %v456, %v408
    %v473 = vsub.f32 %v457, %v409
    %v474 = vsub.f32 %v458, %v410
    %v475 = vsub.f32 %v459, %v411
    %v476 = vsub.f32 %v460, %v412
    %v477 = vsub.f32 %v461, %v413
    %v478 = vsub.f32 %v462, %v414
    %v479 = vsub.f32 %v463, %v415
    %v480 = vsub.f32 %v464, %v416
    %v481 = vsub.f32 %v465, %v417
    %v482 = vsub.f32 %v466, %v418
    %v483 = vsub.f32 %v467, %v419
    %v484 = vld [vmem:[%s1] sm:$0xff]
    %v485 = vld [vmem:[%s1 + $0x8] sm:$0xff]
    %v486 = vld [vmem:[%s1 + $0x10] sm:$0xff]
    %v487 = vld [vmem:[%s1 + $0x18] sm:$0xff]
    %v488 = vld [vmem:[%s1 + $0x20] sm:$0xff]
    %v489 = vld [vmem:[%s1 + $0x28] sm:$0xff]
    %v490 = vld [vmem:[%s1 + $0x30] sm:$0xff]
    %v491 = vld [vmem:[%s1 + $0x38] sm:$0xff]
    %v492 = vld [vmem:[%s2] sm:$0xff]
    %v493 = vld [vmem:[%s2 + $0x8] sm:$0xff]
    %v494 = vld [vmem:[%s2 + $0x10] sm:$0xff]
    %v495 = vld [vmem:[%s2 + $0x18] sm:$0xff]
    %v496 = vld [vmem:[%s2 + $0x20] sm:$0xff]
    %v497 = vld [vmem:[%s2 + $0x28] sm:$0xff]
    %v498 = vld [vmem:[%s2 + $0x30] sm:$0xff]
    %v499 = vld [vmem:[%s2 + $0x38] sm:$0xff]
    %v501 = vsel %vm51, %v468, 0
    %v504 = vsel %vm51, %v469, 0
    %v507 = vsel %vm51, %v470, 0
    %v510 = vsel %vm51, %v471, 0
    %v513 = vsel %vm51, %v472, 0
    %v516 = vsel %vm51, %v473, 0
    %v519 = vsel %vm51, %v474, 0
    %v522 = vsel %vm51, %v475, 0
    %v525 = vsel %vm51, %v476, 0
    %v528 = vsel %vm51, %v477, 0
    %v531 = vsel %vm51, %v478, 0
    %v534 = vsel %vm51, %v479, 0
    %v537 = vsel %vm51, %v480, 0
    %v540 = vsel %vm51, %v481, 0
    %v543 = vsel %vm51, %v482, 0
    %v546 = vsel %vm51, %v483, 0
    %548 = vmatprep.subr.mxu0 0.0
    %549 = vmatpush1.msra.mxu0 %v492
    %550 = vmatprep.subr.mxu0 0.0
    %551 = vmatpush1.msra.mxu0 %v493
    %552 = vmatprep.subr.mxu0 0.0
    %553 = vmatpush1.msra.mxu0 %v494
    %554 = vmatprep.subr.mxu0 0.0
    %555 = vmatpush1.msra.mxu0 %v495
    %556 = vmatprep.subr.mxu0 0.0
    %557 = vmatpush1.msra.mxu0 %v496
    %558 = vmatprep.subr.mxu0 0.0
    %559 = vmatpush1.msra.mxu0 %v497
    %560 = vmatprep.subr.mxu0 0.0
    %561 = vmatpush1.msra.mxu0 %v498
    %562 = vmatprep.subr.mxu0 0.0
    %563 = vmatpush1.msra.mxu0 %v499
    %564 = vmatprep.subr.mxu0 0.0
    %565 = vmatpush1.msra.mxu0 0.0
    %566 = vmatprep.subr.mxu0 0.0
    %567 = vmatpush1.msra.mxu0 0.0
    %568 = vmatprep.subr.mxu0 0.0
    %569 = vmatpush1.msra.mxu0 0.0
    %570 = vmatprep.subr.mxu0 0.0
    %571 = vmatpush1.msra.mxu0 0.0
    %572 = vmatprep.subr.mxu0 0.0
    %573 = vmatpush1.msra.mxu0 0.0
    %574 = vmatprep.subr.mxu0 0.0
    %575 = vmatpush1.msra.mxu0 0.0
    %576 = vmatprep.subr.mxu0 0.0
    %577 = vmatpush1.msra.mxu0 0.0
    %578 = vmatprep.subr.mxu0 0.0
    %579 = vmatpush1.msra.mxu0 0.0
    %580 = vmatprep.subr.mxu0 0.0
    %581 = vmatpush1.msra.mxu0 0.0
    %582 = vmatprep.subr.mxu0 0.0
    %583 = vmatpush1.msra.mxu0 0.0
    %584 = vmatprep.subr.mxu0 0.0
    %585 = vmatpush1.msra.mxu0 0.0
    %586 = vmatprep.subr.mxu0 0.0
    %587 = vmatpush1.msra.mxu0 0.0
    %588 = vmatprep.subr.mxu0 0.0
    %589 = vmatpush1.msra.mxu0 0.0
    %590 = vmatprep.subr.mxu0 0.0
    %591 = vmatpush1.msra.mxu0 0.0
    %592 = vmatprep.subr.mxu0 0.0
    %593 = vmatpush1.msra.mxu0 0.0
    %594 = vmatprep.subr.mxu0 0.0
    %595 = vmatpush1.msra.mxu0 0.0
    %596 = vmatprep.subr.mxu0 0.0
    %597 = vmatpush1.msra.mxu0 0.0
    %598 = vmatprep.subr.mxu0 0.0
    %599 = vmatpush1.msra.mxu0 0.0
    %600 = vmatprep.subr.mxu0 0.0
    %601 = vmatpush1.msra.mxu0 0.0
    %602 = vmatprep.subr.mxu0 0.0
    %603 = vmatpush1.msra.mxu0 0.0
    %604 = vmatprep.subr.mxu0 0.0
    %605 = vmatpush1.msra.mxu0 0.0
    %606 = vmatprep.subr.mxu0 0.0
    %607 = vmatpush1.msra.mxu0 0.0
    %608 = vmatprep.subr.mxu0 0.0
    %609 = vmatpush1.msra.mxu0 0.0
    %610 = vmatprep.subr.mxu0 0.0
    %611 = vmatpush1.msra.mxu0 0.0
    %612 = vmatprep.mubr.f32.mxu0 0.0
    %613 = vmatmul.mubr.f32.gmra.mrb[0].mxu0 %v501
    %v614 = vpop.f32.mrb[0].mxu0
    %v615 = vadd.f32 0.0, %v614
    %v616 = vpop.f32.mrb[0].mxu0
    %617 = vmatprep.mubr.f32.mxu0 0.0
    %618 = vmatmul.mubr.f32.gmra.mrb[0].mxu0 %v504
    %v619 = vpop.f32.mrb[0].mxu0
    %v620 = vadd.f32 0.0, %v619
    %v621 = vpop.f32.mrb[0].mxu0
    %622 = vmatprep.mubr.f32.mxu0 0.0
    %623 = vmatmul.mubr.f32.gmra.mrb[0].mxu0 %v507
    %v624 = vpop.f32.mrb[0].mxu0
    %v625 = vadd.f32 0.0, %v624
    %v626 = vpop.f32.mrb[0].mxu0
    %627 = vmatprep.mubr.f32.mxu0 0.0
    %628 = vmatmul.mubr.f32.gmra.mrb[0].mxu0 %v510
    %v629 = vpop.f32.mrb[0].mxu0
    %v630 = vadd.f32 0.0, %v629
    %v631 = vpop.f32.mrb[0].mxu0
    %632 = vmatprep.mubr.f32.mxu0 0.0
    %633 = vmatmul.mubr.f32.gmra.mrb[0].mxu0 %v513
    %v634 = vpop.f32.mrb[0].mxu0
    %v635 = vadd.f32 0.0, %v634
    %v636 = vpop.f32.mrb[0].mxu0
    %637 = vmatprep.mubr.f32.mxu0 0.0
    %638 = vmatmul.mubr.f32.gmra.mrb[0].mxu0 %v516
    %v639 = vpop.f32.mrb[0].mxu0
    %v640 = vadd.f32 0.0, %v639
    %v641 = vpop.f32.mrb[0].mxu0
    %642 = vmatprep.mubr.f32.mxu0 0.0
    %643 = vmatmul.mubr.f32.gmra.mrb[0].mxu0 %v519
    %v644 = vpop.f32.mrb[0].mxu0
    %v645 = vadd.f32 0.0, %v644
    %v646 = vpop.f32.mrb[0].mxu0
    %647 = vmatprep.mubr.f32.mxu0 0.0
    %648 = vmatmul.mubr.f32.gmra.mrb[0].mxu0 %v522
    %v649 = vpop.f32.mrb[0].mxu0
    %v650 = vadd.f32 0.0, %v649
    %v651 = vpop.f32.mrb[0].mxu0
    %652 = vmatprep.mubr.f32.mxu0 0.0
    %653 = vmatmul.mubr.f32.gmra.mrb[0].mxu0 %v525
    %v654 = vpop.f32.mrb[0].mxu0
    %v655 = vadd.f32 0.0, %v654
    %v656 = vpop.f32.mrb[0].mxu0
    %657 = vmatprep.mubr.f32.mxu0 0.0
    %658 = vmatmul.mubr.f32.gmra.mrb[0].mxu0 %v528
    %v659 = vpop.f32.mrb[0].mxu0
    %v660 = vadd.f32 0.0, %v659
    %v661 = vpop.f32.mrb[0].mxu0
    %662 = vmatprep.mubr.f32.mxu0 0.0
    %663 = vmatmul.mubr.f32.gmra.mrb[0].mxu0 %v531
    %v664 = vpop.f32.mrb[0].mxu0
    %v665 = vadd.f32 0.0, %v664
    %v666 = vpop.f32.mrb[0].mxu0
    %667 = vmatprep.mubr.f32.mxu0 0.0
    %668 = vmatmul.mubr.f32.gmra.mrb[0].mxu0 %v534
    %v669 = vpop.f32.mrb[0].mxu0
    %v670 = vadd.f32 0.0, %v669
    %v671 = vpop.f32.mrb[0].mxu0
    %672 = vmatprep.mubr.f32.mxu0 0.0
    %673 = vmatmul.mubr.f32.gmra.mrb[0].mxu0 %v537
    %v674 = vpop.f32.mrb[0].mxu0
    %v675 = vadd.f32 0.0, %v674
    %v676 = vpop.f32.mrb[0].mxu0
    %677 = vmatprep.mubr.f32.mxu0 0.0
    %678 = vmatmul.mubr.f32.gmra.mrb[0].mxu0 %v540
    %v679 = vpop.f32.mrb[0].mxu0
    %v680 = vadd.f32 0.0, %v679
    %v681 = vpop.f32.mrb[0].mxu0
    %682 = vmatprep.mubr.f32.mxu0 0.0
    %683 = vmatmul.mubr.f32.gmra.mrb[0].mxu0 %v543
    %v684 = vpop.f32.mrb[0].mxu0
    %v685 = vadd.f32 0.0, %v684
    %v686 = vpop.f32.mrb[0].mxu0
    %687 = vmatprep.mubr.f32.mxu0 0.0
    %688 = vmatmul.mubr.f32.gmra.mrb[0].mxu0 %v546
    %v689 = vpop.f32.mrb[0].mxu0
    %v690 = vadd.f32 0.0, %v689
    %v691 = vpop.f32.mrb[0].mxu0
    %692 = vdwg.mxu0
    %v694 = vsel %vm51, %v436, 0
    %v697 = vsel %vm51, %v437, 0
    %v700 = vsel %vm51, %v438, 0
    %v703 = vsel %vm51, %v439, 0
    %v706 = vsel %vm51, %v440, 0
    %v709 = vsel %vm51, %v441, 0
    %v712 = vsel %vm51, %v442, 0
    %v715 = vsel %vm51, %v443, 0
    %v718 = vsel %vm51, %v444, 0
    %v721 = vsel %vm51, %v445, 0
    %v724 = vsel %vm51, %v446, 0
    %v727 = vsel %vm51, %v447, 0
    %v730 = vsel %vm51, %v448, 0
    %v733 = vsel %vm51, %v449, 0
    %v736 = vsel %vm51, %v450, 0
    %v739 = vsel %vm51, %v451, 0
    %741 = vmatprep.subr.mxu0 0.0
    %742 = vmatpush1.msra.mxu0 %v484
    %743 = vmatprep.subr.mxu0 0.0
    %744 = vmatpush1.msra.mxu0 %v485
    %745 = vmatprep.subr.mxu0 0.0
    %746 = vmatpush1.msra.mxu0 %v486
    %747 = vmatprep.subr.mxu0 0.0
    %748 = vmatpush1.msra.mxu0 %v487
    %749 = vmatprep.subr.mxu0 0.0
    %750 = vmatpush1.msra.mxu0 %v488
    %751 = vmatprep.subr.mxu0 0.0
    %752 = vmatpush1.msra.mxu0 %v489
    %753 = vmatprep.subr.mxu0 0.0
    %754 = vmatpush1.msra.mxu0 %v490
    %755 = vmatprep.subr.mxu0 0.0
    %756 = vmatpush1.msra.mxu0 %v491
    %757 = vmatprep.subr.mxu0 0.0
    %758 = vmatpush1.msra.mxu0 0.0
    %759 = vmatprep.subr.mxu0 0.0
    %760 = vmatpush1.msra.mxu0 0.0
    %761 = vmatprep.subr.mxu0 0.0
    %762 = vmatpush1.msra.mxu0 0.0
    %763 = vmatprep.subr.mxu0 0.0
    %764 = vmatpush1.msra.mxu0 0.0
    %765 = vmatprep.subr.mxu0 0.0
    %766 = vmatpush1.msra.mxu0 0.0
    %767 = vmatprep.subr.mxu0 0.0
    %768 = vmatpush1.msra.mxu0 0.0
    %769 = vmatprep.subr.mxu0 0.0
    %770 = vmatpush1.msra.mxu0 0.0
    %771 = vmatprep.subr.mxu0 0.0
    %772 = vmatpush1.msra.mxu0 0.0
    %773 = vmatprep.subr.mxu0 0.0
    %774 = vmatpush1.msra.mxu0 0.0
    %775 = vmatprep.subr.mxu0 0.0
    %776 = vmatpush1.msra.mxu0 0.0
    %777 = vmatprep.subr.mxu0 0.0
    %778 = vmatpush1.msra.mxu0 0.0
    %779 = vmatprep.subr.mxu0 0.0
    %780 = vmatpush1.msra.mxu0 0.0
    %781 = vmatprep.subr.mxu0 0.0
    %782 = vmatpush1.msra.mxu0 0.0
    %783 = vmatprep.subr.mxu0 0.0
    %784 = vmatpush1.msra.mxu0 0.0
    %785 = vmatprep.subr.mxu0 0.0
    %786 = vmatpush1.msra.mxu0 0.0
    %787 = vmatprep.subr.mxu0 0.0
    %788 = vmatpush1.msra.mxu0 0.0
    %789 = vmatprep.subr.mxu0 0.0
    %790 = vmatpush1.msra.mxu0 0.0
    %791 = vmatprep.subr.mxu0 0.0
    %792 = vmatpush1.msra.mxu0 0.0
    %793 = vmatprep.subr.mxu0 0.0
    %794 = vmatpush1.msra.mxu0 0.0
    %795 = vmatprep.subr.mxu0 0.0
    %796 = vmatpush1.msra.mxu0 0.0
    %797 = vmatprep.subr.mxu0 0.0
    %798 = vmatpush1.msra.mxu0 0.0
    %799 = vmatprep.subr.mxu0 0.0
    %800 = vmatpush1.msra.mxu0 0.0
    %801 = vmatprep.subr.mxu0 0.0
    %802 = vmatpush1.msra.mxu0 0.0
    %803 = vmatprep.subr.mxu0 0.0
    %804 = vmatpush1.msra.mxu0 0.0
    %805 = vmatprep.mubr.f32.mxu0 0.0
    %806 = vmatmul.mubr.f32.gmra.mrb[0].mxu0 %v694
    %v807 = vpop.f32.mrb[0].mxu0
    %v808 = vadd.f32 %v615, %v807
    %v809 = vpop.f32.mrb[0].mxu0
    %810 = vmatprep.mubr.f32.mxu0 0.0
    %811 = vmatmul.mubr.f32.gmra.mrb[0].mxu0 %v697
    %v812 = vpop.f32.mrb[0].mxu0
    %v813 = vadd.f32 %v620, %v812
    %v814 = vpop.f32.mrb[0].mxu0
    %815 = vmatprep.mubr.f32.mxu0 0.0
    %816 = vmatmul.mubr.f32.gmra.mrb[0].mxu0 %v700
    %v817 = vpop.f32.mrb[0].mxu0
    %v818 = vadd.f32 %v625, %v817
    %v819 = vpop.f32.mrb[0].mxu0
    %820 = vmatprep.mubr.f32.mxu0 0.0
    %821 = vmatmul.mubr.f32.gmra.mrb[0].mxu0 %v703
    %v822 = vpop.f32.mrb[0].mxu0
    %v823 = vadd.f32 %v630, %v822
    %v824 = vpop.f32.mrb[0].mxu0
    %825 = vmatprep.mubr.f32.mxu0 0.0
    %826 = vmatmul.mubr.f32.gmra.mrb[0].mxu0 %v706
    %v827 = vpop.f32.mrb[0].mxu0
    %v828 = vadd.f32 %v635, %v827
    %v829 = vpop.f32.mrb[0].mxu0
    %830 = vmatprep.mubr.f32.mxu0 0.0
    %831 = vmatmul.mubr.f32.gmra.mrb[0].mxu0 %v709
    %v832 = vpop.f32.mrb[0].mxu0
    %v833 = vadd.f32 %v640, %v832
    %v834 = vpop.f32.mrb[0].mxu0
    %835 = vmatprep.mubr.f32.mxu0 0.0
    %836 = vmatmul.mubr.f32.gmra.mrb[0].mxu0 %v712
    %v837 = vpop.f32.mrb[0].mxu0
    %v838 = vadd.f32 %v645, %v837
    %v839 = vpop.f32.mrb[0].mxu0
    %840 = vmatprep.mubr.f32.mxu0 0.0
    %841 = vmatmul.mubr.f32.gmra.mrb[0].mxu0 %v715
    %v842 = vpop.f32.mrb[0].mxu0
    %v843 = vadd.f32 %v650, %v842
    %v844 = vpop.f32.mrb[0].mxu0
    %845 = vmatprep.mubr.f32.mxu0 0.0
    %846 = vmatmul.mubr.f32.gmra.mrb[0].mxu0 %v718
    %v847 = vpop.f32.mrb[0].mxu0
    %v848 = vadd.f32 %v655, %v847
    %v849 = vpop.f32.mrb[0].mxu0
    %850 = vmatprep.mubr.f32.mxu0 0.0
    %851 = vmatmul.mubr.f32.gmra.mrb[0].mxu0 %v721
    %v852 = vpop.f32.mrb[0].mxu0
    %v853 = vadd.f32 %v660, %v852
    %v854 = vpop.f32.mrb[0].mxu0
    %855 = vmatprep.mubr.f32.mxu0 0.0
    %856 = vmatmul.mubr.f32.gmra.mrb[0].mxu0 %v724
    %v857 = vpop.f32.mrb[0].mxu0
    %v858 = vadd.f32 %v665, %v857
    %v859 = vpop.f32.mrb[0].mxu0
    %860 = vmatprep.mubr.f32.mxu0 0.0
    %861 = vmatmul.mubr.f32.gmra.mrb[0].mxu0 %v727
    %v862 = vpop.f32.mrb[0].mxu0
    %v863 = vadd.f32 %v670, %v862
    %v864 = vpop.f32.mrb[0].mxu0
    %865 = vmatprep.mubr.f32.mxu0 0.0
    %866 = vmatmul.mubr.f32.gmra.mrb[0].mxu0 %v730
    %v867 = vpop.f32.mrb[0].mxu0
    %v868 = vadd.f32 %v675, %v867
    %v869 = vpop.f32.mrb[0].mxu0
    %870 = vmatprep.mubr.f32.mxu0 0.0
    %871 = vmatmul.mubr.f32.gmra.mrb[0].mxu0 %v733
    %v872 = vpop.f32.mrb[0].mxu0
    %v873 = vadd.f32 %v680, %v872
    %v874 = vpop.f32.mrb[0].mxu0
    %875 = vmatprep.mubr.f32.mxu0 0.0
    %876 = vmatmul.mubr.f32.gmra.mrb[0].mxu0 %v736
    %v877 = vpop.f32.mrb[0].mxu0
    %v878 = vadd.f32 %v685, %v877
    %v879 = vpop.f32.mrb[0].mxu0
    %880 = vmatprep.mubr.f32.mxu0 0.0
    %881 = vmatmul.mubr.f32.gmra.mrb[0].mxu0 %v739
    %v882 = vpop.f32.mrb[0].mxu0
    %v883 = vadd.f32 %v690, %v882
    %v884 = vpop.f32.mrb[0].mxu0
    %885 = vdwg.mxu0
    %v886 = vld [vmem:[%s3] sm:$0x1]
    %v888 = vlaneseq
    %v889 = vshrl.u32 %v888, 7
    %v890 = vsub.s32 0, %v889
    %v891 = vrot.slane %v886, %v890
    %v893 = vadd.f32 %v808, %v891
    %v894 = vadd.f32 %v813, %v891
    %v895 = vadd.f32 %v818, %v891
    %v896 = vadd.f32 %v823, %v891
    %v897 = vadd.f32 %v828, %v891
    %v898 = vadd.f32 %v833, %v891
    %v899 = vadd.f32 %v838, %v891
    %v900 = vadd.f32 %v843, %v891
    %v901 = vadd.f32 %v848, %v891
    %v902 = vadd.f32 %v853, %v891
    %v903 = vadd.f32 %v858, %v891
    %v904 = vadd.f32 %v863, %v891
    %v905 = vadd.f32 %v868, %v891
    %v906 = vadd.f32 %v873, %v891
    %v907 = vadd.f32 %v878, %v891
    %v908 = vadd.f32 %v883, %v891
    %909 = vst.msk [vmem:[#allocation2] sm:$0xff] %vm51, %v893
    %910 = vst.msk [vmem:[#allocation2 + $0x8] sm:$0xff] %vm51, %v894
    %911 = vst.msk [vmem:[#allocation2 + $0x10] sm:$0xff] %vm51, %v895
    %912 = vst.msk [vmem:[#allocation2 + $0x18] sm:$0xff] %vm51, %v896
    %913 = vst.msk [vmem:[#allocation2 + $0x20] sm:$0xff] %vm51, %v897
    %914 = vst.msk [vmem:[#allocation2 + $0x28] sm:$0xff] %vm51, %v898
    %915 = vst.msk [vmem:[#allocation2 + $0x30] sm:$0xff] %vm51, %v899
    %916 = vst.msk [vmem:[#allocation2 + $0x38] sm:$0xff] %vm51, %v900
    %917 = vst.msk [vmem:[#allocation2 + $0x40] sm:$0xff] %vm51, %v901
    %918 = vst.msk [vmem:[#allocation2 + $0x48] sm:$0xff] %vm51, %v902
    %919 = vst.msk [vmem:[#allocation2 + $0x50] sm:$0xff] %vm51, %v903
    %920 = vst.msk [vmem:[#allocation2 + $0x58] sm:$0xff] %vm51, %v904
    %921 = vst.msk [vmem:[#allocation2 + $0x60] sm:$0xff] %vm51, %v905
    %922 = vst.msk [vmem:[#allocation2 + $0x68] sm:$0xff] %vm51, %v906
    %923 = vst.msk [vmem:[#allocation2 + $0x70] sm:$0xff] %vm51, %v907
    %924 = vst.msk [vmem:[#allocation2 + $0x78] sm:$0xff] %vm51, %v908
    // Predicated region
    $region18: #{patch_merging_2d.1} parent=1 // pred_check
      _
    $region19: #{patch_merging_2d.1} parent=1 // pred_check_branch
      %926 = sbr.rel (0) target = $region21
    $region20: #{patch_merging_2d.1} parent=1 // pred_region
      %s928 = ssub.s32 2048, 2048
      %929 = vsyncadd [#allocation3], %s928
      %s930 = sshll.u32 [#allocation2], 4
      %s931 = int_to_ptr.vmem [resolvable:$true] %s930
      %936 = dma.vmem_to_hbm [thread:$0]  %s931, 2048, %s4, [#allocation3], 128, 128, 8
    $region21: #{patch_merging_2d.1} parent=1 // pred_fallthru
      _
    // Predicated region
    $region22: #{patch_merging_2d.1} parent=1 // pred_check
      _
    $region23: #{patch_merging_2d.1} parent=1 // pred_check_branch
      %938 = sbr.rel (0) target = $region25
    $region24: #{patch_merging_2d.1} parent=1 // pred_region
      %939 = dma.done [#allocation3], 2048
    $region25: #{patch_merging_2d.1} parent=1 // pred_fallthru
      _
    %940 = vsyncpa [#allocation3], 1

</llo_original>
